<compile_context>
chip_gen: v6e
topology: v6e:2x2x1
jax: 0.10.0
libtpu: 0.0.40
codegen_flags: <defaults>
</compile_context>

<pallas_src>
import jax
import jax.numpy as jnp
from jax.experimental import pallas as pl
from jax.experimental.pallas import tpu as pltpu


def _identity_copy_kernel(x_ref, o_ref):
    # Pass-through on the current lane-dense VMEM tile.
    o_ref[...] = x_ref[...]


def _choose_2d_layout(shape, itemsize):
    """Pick a lane-dense (rows, cols) view and a row-tile size (<= ~2 MiB)."""
    total = 1
    for d in shape:
        total *= d
    # Lane-dense columns: prefer a multiple of 128 that divides the tensor.
    cols = total
    for candidate in (1024, 512, 256, 128):
        if total % candidate == 0:
            cols = candidate
            break
    rows = total // cols
    # Row tile: cap a tile at ~2 MiB (safe for v5e/v6e/v7x scoped VMEM with
    # default double-buffering); either full rows or a multiple of 8.
    max_rows = max(1, (2 * 1024 * 1024) // (cols * itemsize))
    if rows <= max_rows:
        tile_r = rows
    else:
        tile_r = max(8, (max_rows // 8) * 8)
    return rows, cols, tile_r


def identity(x):
    """Identity forward pass: y = x.

    Implemented as a single lane-dense Pallas copy with the output aliased to
    the input, so no new HBM buffer is materialized by the kernel itself.
    (The mathematically ideal 'return x' is kept as the semantic spec; the
    pallas_call is retained to exercise the kernel path.)
    """
    orig_shape = x.shape
    itemsize = jnp.dtype(x.dtype).itemsize
    rows, cols, tile_r = _choose_2d_layout(orig_shape, itemsize)

    x2d = x.reshape(rows, cols)  # contiguous row-major: metadata-only reshape

    y2d = pl.pallas_call(
        _identity_copy_kernel,
        out_shape=jax.ShapeDtypeStruct((rows, cols), x.dtype),
        grid_spec=pltpu.PrefetchScalarGridSpec(
            num_scalar_prefetch=0,
            grid=(pl.cdiv(rows, tile_r),),
            in_specs=[pl.BlockSpec((tile_r, cols), lambda i: (i, 0))],
            out_specs=pl.BlockSpec((tile_r, cols), lambda i: (i, 0)),
        ),
        # Alias input 0 -> output 0: no extra HBM output buffer; with jit +
        # buffer donation this makes the identity effectively free.
        input_output_aliases={0: 0},
        compiler_params=pltpu.CompilerParams(
            dimension_semantics=("parallel",)  # lets v7x split steps across TCs
        ),
    )(x2d)

    return y2d.reshape(orig_shape)


if __name__ == "__main__":
    shape = (2, 4, 16, 16)
    dtype = jnp.float32

    x = jax.random.normal(jax.random.PRNGKey(0), shape, dtype=dtype)

    y = identity(x)
    jax.block_until_ready(y)

    # Regenerate the deterministic reference (the input buffer may be aliased
    # into the output, so compare against a fresh copy of the same data).
    x_ref = jax.random.normal(jax.random.PRNGKey(0), shape, dtype=dtype)

    assert y.shape == shape and y.dtype == dtype
    assert bool(jnp.array_equal(y, x_ref))
    print("KERNEL_OK")
</pallas_src>

<mosaic_0001>
module attributes {stable_mosaic.version = 11 : i64} {
  func.func @_identity_copy_kernel(%arg0: i32, %arg1: memref<2x1024xf32, #tpu.memory_space<vmem>>, %arg2: memref<2x1024xf32, #tpu.memory_space<vmem>>) attributes {dimension_semantics = [#tpu.dimension_semantics<parallel>], iteration_bounds = array<i64: 1>, scalar_prefetch = 0 : i64, scratch_operands = 0 : i64, tpu.core_type = #tpu.core_type<tc>, window_params = [{transform_indices = @transform_0, window_bounds = array<i64: 2, 1024>}, {transform_indices = @transform_1, window_bounds = array<i64: 2, 1024>}]} {
    %c0 = arith.constant 0 : index
    %c0_0 = arith.constant 0 : index
    %0 = vector.load %arg1[%c0, %c0_0] : memref<2x1024xf32, #tpu.memory_space<vmem>>, vector<2x1024xf32>
    %c0_1 = arith.constant 0 : index
    %c0_2 = arith.constant 0 : index
    %1 = vector.load %arg2[%c0_1, %c0_2] : memref<2x1024xf32, #tpu.memory_space<vmem>>, vector<2x1024xf32>
    tpu.vector_store %arg2[%c0_1, %c0_2], %0 {strides = array<i32>} : memref<2x1024xf32, #tpu.memory_space<vmem>>, vector<2x1024xf32>,
    return
  }
  func.func @transform_0(%arg0: i32) -> (i32, i32) {
    %c0_i32 = arith.constant 0 : i32
    %c0_i32_0 = arith.constant 0 : i32
    return %arg0, %c0_i32 : i32, i32
  }
  func.func @transform_1(%arg0: i32) -> (i32, i32) {
    %c0_i32 = arith.constant 0 : i32
    %c0_i32_0 = arith.constant 0 : i32
    return %arg0, %c0_i32 : i32, i32
  }
}

</mosaic_0001>

<llo_original>
// kernel: tpu_custom_call.1
$region0: #{tpu_custom_call.1}
  #allocation0 [shape = 'u32[]', space=smem, size = 0x4, offset = 0x4, fixed_abs, tag = 'smem constant byte address 0x4 - core index']
  #allocation1 [shape = 'u32[144,128]{1,0:T(1,128)}', space=vmem, size = 0x12000, scoped, tag = 'internal scratch']
  %s0 = inlined_call_operand.hbm [shape: f32[2,1024], index: 0, kind: input, shape index: {}, may-alias: {0,1}]
  %s1 = inlined_call_operand.hbm [shape: f32[2,1024], index: 1, kind: output, shape index: {}, may-alias: {0,1}]
  %s2 = sld [smem:[#allocation0]]
  $region18: #{tpu_custom_call.1} parent=0
    _
  %s4 = ssub.s32 1, %s2
  %s5 = scalar_select 0, %s4, %s2
  $region1: #{tpu_custom_call.1} parent=0
    #allocation2 [shape = 'u8[8192]{0}', space=vmem, size = 0x2000, scoped, tag = 'input window, operand 0, single buffered']
    #allocation3 [shape = 's32[1]{0}', space=sflag, size = 0x4, scoped, tag = 'scoped memory for tpu_custom_call.1']
    #allocation4 [shape = 's32[1]{0}', space=sflag, size = 0x4, scoped, tag = 'scoped memory for tpu_custom_call.1']
    #allocation5 [shape = 'u8[8192]{0}', space=vmem, size = 0x2000, scoped, tag = 'output window, operand 0, single buffered']
    %6 = vsyncpa [#allocation3], 0
    %7 = vsyncpa [#allocation4], 0
    // Predicated region
    $region2: #{tpu_custom_call.1} parent=1 // pred_check
      _
    $region3: #{tpu_custom_call.1} parent=1 // pred_check_branch
      %9 = sbr.rel (0) target = $region5
    $region4: #{tpu_custom_call.1} parent=1 // pred_region
      %s11 = ssub.s32 256, 256
      %12 = vsyncadd [#allocation3], %s11
      %s14 = sshll.u32 [#allocation2], 4
      %s15 = int_to_ptr.vmem [resolvable:$true] %s14
      %17 = dma.hbm_to_vmem [thread:$0]  %s0, 256, %s15, [#allocation3]
    $region5: #{tpu_custom_call.1} parent=1 // pred_fallthru
      _
    // Predicated region
    $region6: #{tpu_custom_call.1} parent=1 // pred_check
      _
    $region7: #{tpu_custom_call.1} parent=1 // pred_check_branch
      %19 = sbr.rel (0) target = $region9
    $region8: #{tpu_custom_call.1} parent=1 // pred_region
      %20 = dma.done [#allocation3], 256
    $region9: #{tpu_custom_call.1} parent=1 // pred_fallthru
      _
    %v21 = vld [vmem:[#allocation2] sm:$0xff]
    %v22 = vld [vmem:[#allocation2 + $0x8] sm:$0xff]
    %23 = vst [vmem:[#allocation5] sm:$0xff] %v21
    %24 = vst [vmem:[#allocation5 + $0x8] sm:$0xff] %v22
    // Predicated region
    $region10: #{tpu_custom_call.1} parent=1 // pred_check
      _
    $region11: #{tpu_custom_call.1} parent=1 // pred_check_branch
      %26 = sbr.rel (0) target = $region13
    $region12: #{tpu_custom_call.1} parent=1 // pred_region
      %s28 = ssub.s32 256, 256
      %29 = vsyncadd [#allocation4], %s28
      %s31 = sshll.u32 [#allocation5], 4
      %s32 = int_to_ptr.vmem [resolvable:$true] %s31
      %34 = dma.vmem_to_hbm [thread:$0]  %s32, 256, %s1, [#allocation4]
    $region13: #{tpu_custom_call.1} parent=1 // pred_fallthru
      _
    // Predicated region
    $region14: #{tpu_custom_call.1} parent=1 // pred_check
      _
    $region15: #{tpu_custom_call.1} parent=1 // pred_check_branch
      %36 = sbr.rel (0) target = $region17
    $region16: #{tpu_custom_call.1} parent=1 // pred_region
      %37 = dma.done [#allocation4], 256
    $region17: #{tpu_custom_call.1} parent=1 // pred_fallthru
      _
    %38 = vsyncpa [#allocation3], 1
    %39 = vsyncpa [#allocation4], 1

</llo_original>
